<compile_context>
chip_gen: v7x
topology: tpu7x:2x2x1
jax: 0.10.0
libtpu: 0.0.40
codegen_flags: <defaults>
</compile_context>

<pallas_src>
import math

import jax
import jax.numpy as jnp
from jax.experimental import pallas as pl
from jax.experimental.pallas import tpu as pltpu

_LANE = 128
_SUBLANE = 8
# ~2 MiB per block; with double-buffered x + double-buffered out that is
# ~8 MiB of scoped VMEM -> fits the default budget on v5e (16 MiB),
# v6e (32 MiB) and v7x (32 MiB scoped / 64 MiB physical) without flags.
_BLOCK_BYTES = 2 * 1024 * 1024


def _round_up(a, m):
    return ((a + m - 1) // m) * m


def _oto_kernel(x_ref, w_ref, b_ref, o_ref):
    # y = x * w + b.  w_ref / b_ref are (1, tile_n) f32 rows broadcast over
    # the batch-tile rows; math in f32, cast once on store.
    x = x_ref[...].astype(jnp.float32)
    o_ref[...] = (x * w_ref[...] + b_ref[...]).astype(o_ref.dtype)


def oto_layer(x, weight, bias):
    """Apply y[b, i] = x[b, i] * weight[i] + bias[i] via a Pallas TPU kernel.

    x:      (B, n_input)
    weight: (n_input,)
    bias:   (n_input,)
    """
    B, n_input = x.shape
    out_dtype = x.dtype
    w = weight.astype(jnp.float32)
    b = bias.astype(jnp.float32)

    # ---------------- Path A: lane-dense flattened slab ----------------
    # Usable when a modest lane width L exists with L % 128 == 0 and
    # L % n_input == 0 (so the per-lane weight pattern is fixed across rows).
    lcm = n_input * _LANE // math.gcd(n_input, _LANE)
    if lcm <= 2048:
        L = lcm
        while L < 512 and L * 2 <= 2048:
            L *= 2

        total = B * n_input
        rows = -(-total // L)
        max_tile_r = max(_SUBLANE,
                         (_BLOCK_BYTES // (4 * L)) // _SUBLANE * _SUBLANE)
        tile_r = min(max_tile_r, _round_up(rows, _SUBLANE))
        rows_pad = _round_up(rows, tile_r)

        flat = x.reshape(-1)
        pad = rows_pad * L - total
        if pad:
            flat = jnp.pad(flat, (0, pad))
        x2 = flat.reshape(rows_pad, L)

        rep = L // n_input
        w2 = jnp.tile(w, rep).reshape(1, L)
        b2 = jnp.tile(b, rep).reshape(1, L)

        out = pl.pallas_call(
            _oto_kernel,
            out_shape=jax.ShapeDtypeStruct((rows_pad, L), out_dtype),
            grid=(rows_pad // tile_r,),
            in_specs=[
                pl.BlockSpec((tile_r, L), lambda i: (i, 0)),
                pl.BlockSpec((1, L), lambda i: (0, 0)),   # weight (resident)
                pl.BlockSpec((1, L), lambda i: (0, 0)),   # bias   (resident)
            ],
            out_specs=pl.BlockSpec((tile_r, L), lambda i: (i, 0)),
            compiler_params=pltpu.CompilerParams(
                dimension_semantics=("parallel",)),
        )(x2, w2, b2)
        return out.reshape(-1)[:total].reshape(B, n_input)

    # ---------------- Path B: 2-D (batch, feature) tiling ----------------
    n_pad = _round_up(n_input, _LANE)
    tile_n = _LANE
    for cand in (1024, 512, 256, 128):
        if n_pad % cand == 0:
            tile_n = cand
            break

    max_tile_b = max(_SUBLANE,
                     (_BLOCK_BYTES // (4 * tile_n)) // _SUBLANE * _SUBLANE)
    tile_b = min(max_tile_b, _round_up(B, _SUBLANE))
    B_pad = _round_up(B, tile_b)

    x2 = x
    if B_pad != B or n_pad != n_input:
        x2 = jnp.pad(x, ((0, B_pad - B), (0, n_pad - n_input)))
    w2 = jnp.pad(w, (0, n_pad - n_input)).reshape(1, n_pad)
    b2 = jnp.pad(b, (0, n_pad - n_input)).reshape(1, n_pad)

    out = pl.pallas_call(
        _oto_kernel,
        out_shape=jax.ShapeDtypeStruct((B_pad, n_pad), out_dtype),
        grid=(B_pad // tile_b, n_pad // tile_n),
        in_specs=[
            pl.BlockSpec((tile_b, tile_n), lambda i, j: (i, j)),
            pl.BlockSpec((1, tile_n), lambda i, j: (0, j)),   # weight row
            pl.BlockSpec((1, tile_n), lambda i, j: (0, j)),   # bias row
        ],
        out_specs=pl.BlockSpec((tile_b, tile_n), lambda i, j: (i, j)),
        compiler_params=pltpu.CompilerParams(
            dimension_semantics=("parallel", "parallel")),
    )(x2, w2, b2)
    return out[:B, :n_input]


if __name__ == "__main__":
    key = jax.random.PRNGKey(0)

    # Case 1: the canonical small shape (exercises the lane-dense flatten path).
    kx, kw, kb, key = jax.random.split(key, 4)
    B, n_input = 8, 32
    x = jax.random.normal(kx, (B, n_input), dtype=jnp.float32)
    weight = jax.random.normal(kw, (n_input,), dtype=jnp.float32)
    bias = jax.random.normal(kb, (n_input,), dtype=jnp.float32)

    y = jax.block_until_ready(oto_layer(x, weight, bias))
    y_ref = x * weight[None, :] + bias[None, :]
    assert y.shape == (B, n_input)
    assert jnp.allclose(y, y_ref, atol=1e-6, rtol=1e-6)

    # Case 2: ragged batch + awkward feature count (exercises the 2-D tiled path).
    kx2, kw2, kb2, key = jax.random.split(key, 4)
    B2, n2 = 10, 33
    x2 = jax.random.normal(kx2, (B2, n2), dtype=jnp.float32)
    w2 = jax.random.normal(kw2, (n2,), dtype=jnp.float32)
    b2 = jax.random.normal(kb2, (n2,), dtype=jnp.float32)

    y2 = jax.block_until_ready(oto_layer(x2, w2, b2))
    y2_ref = x2 * w2[None, :] + b2[None, :]
    assert y2.shape == (B2, n2)
    assert jnp.allclose(y2, y2_ref, atol=1e-6, rtol=1e-6)

    print("KERNEL_OK")
</pallas_src>

<mosaic_0001>
module attributes {stable_mosaic.version = 11 : i64} {
  func.func @_oto_kernel(%arg0: i32, %arg1: memref<8x512xf32, #tpu.memory_space<vmem>>, %arg2: memref<1x512xf32, #tpu.memory_space<vmem>>, %arg3: memref<1x512xf32, #tpu.memory_space<vmem>>, %arg4: memref<8x512xf32, #tpu.memory_space<vmem>>) attributes {dimension_semantics = [#tpu.dimension_semantics<parallel>], iteration_bounds = array<i64: 1>, scalar_prefetch = 0 : i64, scratch_operands = 0 : i64, tpu.core_type = #tpu.core_type<tc>, window_params = [{transform_indices = @transform_0, window_bounds = array<i64: 8, 512>}, {pipeline_mode = #tpu.pipeline_mode<synchronous>, transform_indices = @transform_1, window_bounds = array<i64: 1, 512>}, {pipeline_mode = #tpu.pipeline_mode<synchronous>, transform_indices = @transform_2, window_bounds = array<i64: 1, 512>}, {transform_indices = @transform_3, window_bounds = array<i64: 8, 512>}]} {
    %c0 = arith.constant 0 : index
    %c0_0 = arith.constant 0 : index
    %0 = vector.load %arg1[%c0, %c0_0] : memref<8x512xf32, #tpu.memory_space<vmem>>, vector<8x512xf32>
    %c0_1 = arith.constant 0 : index
    %c0_2 = arith.constant 0 : index
    %1 = vector.load %arg2[%c0_1, %c0_2] : memref<1x512xf32, #tpu.memory_space<vmem>>, vector<1x512xf32>
    %2 = vector.broadcast %1 : vector<1x512xf32> to vector<8x512xf32>
    %3 = arith.mulf %0, %2 : vector<8x512xf32>
    %c0_3 = arith.constant 0 : index
    %c0_4 = arith.constant 0 : index
    %4 = vector.load %arg3[%c0_3, %c0_4] : memref<1x512xf32, #tpu.memory_space<vmem>>, vector<1x512xf32>
    %5 = vector.broadcast %4 : vector<1x512xf32> to vector<8x512xf32>
    %6 = arith.addf %3, %5 : vector<8x512xf32>
    %c0_5 = arith.constant 0 : index
    %c0_6 = arith.constant 0 : index
    %7 = vector.load %arg4[%c0_5, %c0_6] : memref<8x512xf32, #tpu.memory_space<vmem>>, vector<8x512xf32>
    tpu.vector_store %arg4[%c0_5, %c0_6], %6 {strides = array<i32>} : memref<8x512xf32, #tpu.memory_space<vmem>>, vector<8x512xf32>,
    return
  }
  func.func @transform_0(%arg0: i32) -> (i32, i32) {
    %c0_i32 = arith.constant 0 : i32
    %c0_i32_0 = arith.constant 0 : i32
    return %arg0, %c0_i32 : i32, i32
  }
  func.func @transform_1(%arg0: i32) -> (i32, i32) {
    %c0_i32 = arith.constant 0 : i32
    %c0_i32_0 = arith.constant 0 : i32
    %c0_i32_1 = arith.constant 0 : i32
    return %c0_i32, %c0_i32_0 : i32, i32
  }
  func.func @transform_2(%arg0: i32) -> (i32, i32) {
    %c0_i32 = arith.constant 0 : i32
    %c0_i32_0 = arith.constant 0 : i32
    %c0_i32_1 = arith.constant 0 : i32
    return %c0_i32, %c0_i32_0 : i32, i32
  }
  func.func @transform_3(%arg0: i32) -> (i32, i32) {
    %c0_i32 = arith.constant 0 : i32
    %c0_i32_0 = arith.constant 0 : i32
    return %arg0, %c0_i32 : i32, i32
  }
}

</mosaic_0001>

<llo_original>
// kernel: tpu_custom_call.1
$region0: #{tpu_custom_call.1}
  #allocation0 [shape = 'u32[]', space=smem, size = 0x4, offset = 0x4, fixed_abs, tag = 'smem constant byte address 0x4 - core index']
  #allocation1 [shape = 'u32[144,128]{1,0:T(1,128)}', space=vmem, size = 0x12000, scoped, tag = 'internal scratch']
  %s0 = inlined_call_operand.hbm [shape: f32[8,512], index: 0, kind: input, shape index: {}]
  %s1 = inlined_call_operand.hbm [shape: f32[1,512], index: 1, kind: input, shape index: {}]
  %s2 = inlined_call_operand.vmem [shape: f32[1,512], index: 2, kind: input, shape index: {}]
  %s3 = inlined_call_operand.hbm [shape: f32[8,512], index: 3, kind: output, shape index: {}]
  %s4 = sld [smem:[#allocation0]]
  $region30: #{tpu_custom_call.1} parent=0
    _
  %s6 = ssub.s32 1, %s4
  %s7 = scalar_select 0, %s6, %s4
  $region1: #{tpu_custom_call.1} parent=0
    #allocation2 [shape = 'u8[16384]{0}', space=vmem, size = 0x4000, scoped, tag = 'input window, operand 0, single buffered']
    #allocation3 [shape = 's32[1]{0}', space=sflag, size = 0x4, scoped, tag = 'scoped memory for tpu_custom_call.1']
    #allocation4 [shape = 's32[1]{0}', space=sflag, size = 0x4, scoped, tag = 'scoped memory for tpu_custom_call.1']
    #allocation5 [shape = 'u8[2048]{0}', space=vmem, size = 0x800, scoped, tag = 'input window, operand 1, single buffered']
    #allocation6 [shape = 's32[1]{0}', space=sflag, size = 0x4, scoped, tag = 'scoped memory for tpu_custom_call.1']
    #allocation7 [shape = 'u8[16384]{0}', space=vmem, size = 0x4000, scoped, tag = 'output window, operand 0, single buffered']
    %8 = vsyncpa [#allocation3], 0
    %9 = vsyncpa [#allocation6], 0
    %10 = vsyncpa [#allocation4], 0
    // Predicated region
    $region2: #{tpu_custom_call.1} parent=1 // pred_check
      _
    $region3: #{tpu_custom_call.1} parent=1 // pred_check_branch
      %12 = sbr.rel (0) target = $region5
    $region4: #{tpu_custom_call.1} parent=1 // pred_region
      %s14 = ssub.s32 512, 512
      %15 = vsyncadd [#allocation3], %s14
      %s17 = sshll.u32 [#allocation2], 4
      %s18 = int_to_ptr.vmem [resolvable:$true] %s17
      %20 = dma.hbm_to_vmem [thread:$0]  %s0, 512, %s18, [#allocation3]
    $region5: #{tpu_custom_call.1} parent=1 // pred_fallthru
      _
    // Predicated region
    $region6: #{tpu_custom_call.1} parent=1 // pred_check
      _
    $region7: #{tpu_custom_call.1} parent=1 // pred_check_branch
      %22 = sbr.rel (0) target = $region9
    $region8: #{tpu_custom_call.1} parent=1 // pred_region
      %s24 = ssub.s32 64, 64
      %25 = vsyncadd [#allocation6], %s24
      %s27 = sshll.u32 [#allocation5], 4
      %s28 = int_to_ptr.vmem [resolvable:$true] %s27
      %30 = dma.hbm_to_vmem [thread:$0]  %s1, 64, %s28, [#allocation6]
    $region9: #{tpu_custom_call.1} parent=1 // pred_fallthru
      _
    // Predicated region
    $region10: #{tpu_custom_call.1} parent=1 // pred_check
      _
    $region11: #{tpu_custom_call.1} parent=1 // pred_check_branch
      %32 = sbr.rel (0) target = $region13
    $region12: #{tpu_custom_call.1} parent=1 // pred_region
      _
    $region13: #{tpu_custom_call.1} parent=1 // pred_fallthru
      _
    // Predicated region
    $region14: #{tpu_custom_call.1} parent=1 // pred_check
      _
    $region15: #{tpu_custom_call.1} parent=1 // pred_check_branch
      %34 = sbr.rel (0) target = $region17
    $region16: #{tpu_custom_call.1} parent=1 // pred_region
      %35 = dma.done [#allocation3], 512
    $region17: #{tpu_custom_call.1} parent=1 // pred_fallthru
      _
    // Predicated region
    $region18: #{tpu_custom_call.1} parent=1 // pred_check
      _
    $region19: #{tpu_custom_call.1} parent=1 // pred_check_branch
      %37 = sbr.rel (0) target = $region21
    $region20: #{tpu_custom_call.1} parent=1 // pred_region
      %38 = dma.done [#allocation6], 64
    $region21: #{tpu_custom_call.1} parent=1 // pred_fallthru
      _
    %v39 = vld [vmem:[#allocation2] sm:$0xff]
    %v40 = vld [vmem:[#allocation2 + $0x8] sm:$0xff]
    %v41 = vld [vmem:[#allocation2 + $0x10] sm:$0xff]
    %v42 = vld [vmem:[#allocation2 + $0x18] sm:$0xff]
    %v43 = vld [vmem:[#allocation5] sm:$0xf]
    %v45 = vlaneseq
    %v46 = vshrl.u32 %v45, 7
    %v47 = vsub.s32 0, %v46
    %v48 = vrot.slane %v43, %v47
    %v49 = vlaneseq
    %v50 = vshrl.u32 %v49, 7
    %v51 = vsub.s32 1, %v50
    %v52 = vrot.slane %v43, %v51
    %v53 = vlaneseq
    %v54 = vshrl.u32 %v53, 7
    %v55 = vsub.s32 2, %v54
    %v56 = vrot.slane %v43, %v55
    %v57 = vlaneseq
    %v58 = vshrl.u32 %v57, 7
    %v59 = vsub.s32 3, %v58
    %v60 = vrot.slane %v43, %v59
    %v65 = vmul.f32 %v39, %v48
    %v66 = vmul.f32 %v40, %v52
    %v67 = vmul.f32 %v41, %v56
    %v68 = vmul.f32 %v42, %v60
    %v69 = vld [vmem:[%s2] sm:$0xf]
    %v71 = vlaneseq
    %v72 = vshrl.u32 %v71, 7
    %v73 = vsub.s32 0, %v72
    %v74 = vrot.slane %v69, %v73
    %v75 = vlaneseq
    %v76 = vshrl.u32 %v75, 7
    %v77 = vsub.s32 1, %v76
    %v78 = vrot.slane %v69, %v77
    %v79 = vlaneseq
    %v80 = vshrl.u32 %v79, 7
    %v81 = vsub.s32 2, %v80
    %v82 = vrot.slane %v69, %v81
    %v83 = vlaneseq
    %v84 = vshrl.u32 %v83, 7
    %v85 = vsub.s32 3, %v84
    %v86 = vrot.slane %v69, %v85
    %v91 = vadd.f32 %v65, %v74
    %v92 = vadd.f32 %v66, %v78
    %v93 = vadd.f32 %v67, %v82
    %v94 = vadd.f32 %v68, %v86
    %95 = vst [vmem:[#allocation7] sm:$0xff] %v91
    %96 = vst [vmem:[#allocation7 + $0x8] sm:$0xff] %v92
    %97 = vst [vmem:[#allocation7 + $0x10] sm:$0xff] %v93
    %98 = vst [vmem:[#allocation7 + $0x18] sm:$0xff] %v94
    // Predicated region
    $region22: #{tpu_custom_call.1} parent=1 // pred_check
      _
    $region23: #{tpu_custom_call.1} parent=1 // pred_check_branch
      %100 = sbr.rel (0) target = $region25
    $region24: #{tpu_custom_call.1} parent=1 // pred_region
      %s102 = ssub.s32 512, 512
      %103 = vsyncadd [#allocation4], %s102
      %s105 = sshll.u32 [#allocation7], 4
      %s106 = int_to_ptr.vmem [resolvable:$true] %s105
      %108 = dma.vmem_to_hbm [thread:$0]  %s106, 512, %s3, [#allocation4]
    $region25: #{tpu_custom_call.1} parent=1 // pred_fallthru
      _
    // Predicated region
    $region26: #{tpu_custom_call.1} parent=1 // pred_check
      _
    $region27: #{tpu_custom_call.1} parent=1 // pred_check_branch
      %110 = sbr.rel (0) target = $region29
    $region28: #{tpu_custom_call.1} parent=1 // pred_region
      %111 = dma.done [#allocation4], 512
    $region29: #{tpu_custom_call.1} parent=1 // pred_fallthru
      _
    %112 = vsyncpa [#allocation3], 1
    %113 = vsyncpa [#allocation6], 1
    %114 = vsyncpa [#allocation4], 1

</llo_original>
